<compile_context>
chip_gen: v6e
topology: v6e:2x2x1
jax: 0.10.0
libtpu: 0.0.40
codegen_flags: <defaults>
</compile_context>

<pallas_src>
import jax
import jax.numpy as jnp
from jax import lax
from jax.experimental import pallas as pl
from jax.experimental.pallas import tpu as pltpu


# ---------------------------------------------------------------- kernels ---

def _gather_kernel(ids_ref, w_ref, out_ref):
    # ids_ref: (TILE_N, 1) int32 ; w_ref: (K, D) resident ; out_ref: (TILE_N, D)
    idx = ids_ref[...][:, 0]                                   # (TILE_N,)
    gathered = jnp.take(w_ref[...], idx, axis=0, mode="promise_in_bounds")
    out_ref[...] = gathered.astype(out_ref.dtype)


def _onehot_kernel(ids_ref, w_ref, out_ref):
    # Fallback: exact gather via one-hot matmul on the MXU (validated path).
    ids = ids_ref[...]                                         # (TILE_N, 1)
    tile_n = ids.shape[0]
    k = w_ref.shape[0]
    iota = lax.broadcasted_iota(jnp.int32, (tile_n, k), 1)
    onehot = (iota == ids).astype(w_ref.dtype)                 # (TILE_N, K)
    out_ref[...] = jnp.dot(
        onehot, w_ref[...], preferred_element_type=jnp.float32
    ).astype(out_ref.dtype)


# ----------------------------------------------------------------- driver ---

def _build_call(kernel, k, d, dtype, tile_n, n_tiles, single_buffer_weight):
    if single_buffer_weight:
        # Constant index_map -> one resident buffer is enough; saves K*D*itemsize.
        w_spec = pl.BlockSpec((k, d), lambda i: (0, 0),
                              pipeline_mode=pl.Buffered(1))
        w_bufs = 1
    else:
        w_spec = pl.BlockSpec((k, d), lambda i: (0, 0))
        w_bufs = 2

    itemsize = jnp.dtype(dtype).itemsize
    needed = (
        k * d * itemsize * w_bufs             # resident codebook
        + 2 * tile_n * 4                      # double-buffered index tiles
        + 2 * tile_n * d * itemsize           # double-buffered output tiles
        + (4 << 20)                           # headroom
    )
    vmem_limit = int(max(needed, 32 * 1024 * 1024))

    return pl.pallas_call(
        kernel,
        out_shape=jax.ShapeDtypeStruct((n_tiles * tile_n, d), dtype),
        grid_spec=pltpu.PrefetchScalarGridSpec(
            num_scalar_prefetch=0,
            grid=(n_tiles,),
            in_specs=[
                pl.BlockSpec((tile_n, 1), lambda i: (i, 0)),   # index tile
                w_spec,                                        # resident codebook
            ],
            out_specs=pl.BlockSpec((tile_n, d), lambda i: (i, 0)),
        ),
        compiler_params=pltpu.CompilerParams(
            dimension_semantics=("parallel",),
            vmem_limit_bytes=vmem_limit,
        ),
    )


_PLAN_CACHE = {}  # (k, d, dtype, tile_n, n_tiles) -> (kernel, single_buffer)

_CANDIDATE_PLANS = (
    (_gather_kernel, True),     # preferred: in-VMEM gather, single-buffered codebook
    (_gather_kernel, False),    # gather with default buffering
    (_onehot_kernel, False),    # validated one-hot MXU fallback
)


def embedding_lookup(embed_id, weight, *, tile_n=512):
    """Pallas equivalent of F.embedding(embed_id, weight)."""
    k, d = weight.shape
    orig_shape = embed_id.shape

    flat = embed_id.reshape(-1).astype(jnp.int32)
    flat = jnp.clip(flat, 0, k - 1)            # keep indices valid for the kernel
    n = flat.shape[0]

    # Tile: multiple of 8 (sublane granularity), no larger than the padded N
    # (avoids wasted work on pad rows for small inputs).
    tile_n = max(8, (int(tile_n) + 7) // 8 * 8)
    tile_n = min(tile_n, pl.cdiv(n, 8) * 8)
    n_pad = pl.cdiv(n, tile_n) * tile_n
    if n_pad != n:
        flat = jnp.pad(flat, (0, n_pad - n))   # pad rows sliced off below
    ids2d = flat.reshape(n_pad, 1)
    n_tiles = n_pad // tile_n

    cache_key = (int(k), int(d), str(jnp.dtype(weight.dtype)), tile_n, n_tiles)
    plans = ((_PLAN_CACHE[cache_key],)
             if cache_key in _PLAN_CACHE else _CANDIDATE_PLANS)

    last_err = None
    for kern, single_buf in plans:
        try:
            call = _build_call(kern, k, d, weight.dtype, tile_n, n_tiles, single_buf)
            out = jax.block_until_ready(call(ids2d, weight))
        except Exception as err:               # lowering/compile failure -> next plan
            last_err = err
            continue
        _PLAN_CACHE[cache_key] = (kern, single_buf)
        return out[:n].reshape(*orig_shape, d)
    raise last_err


# ----------------------------------------------------------------- module ---

class EmbeddingEMA:
    """JAX port of taming EmbeddingEMA (forward = embedding lookup)."""

    def __init__(self, num_tokens, codebook_dim, decay=0.99, eps=1e-5, *, key):
        self.decay = decay
        self.eps = eps
        self.num_tokens = num_tokens
        self.codebook_dim = codebook_dim
        weight = jax.random.normal(key, (num_tokens, codebook_dim), dtype=jnp.float32)
        self.weight = weight
        self.cluster_size = jnp.zeros((num_tokens,), dtype=jnp.float32)
        self.embed_avg = weight.copy()
        self.update = True

    def forward(self, embed_id):
        return embedding_lookup(embed_id, self.weight)

    # EMA buffer updates are trivial elementwise ops, kept as plain JAX glue:
    def cluster_size_ema_update(self, new_cluster_size):
        self.cluster_size = (
            self.cluster_size * self.decay + new_cluster_size * (1.0 - self.decay)
        )

    def embed_avg_ema_update(self, new_embed_avg):
        self.embed_avg = (
            self.embed_avg * self.decay + new_embed_avg * (1.0 - self.decay)
        )

    def weight_update(self, num_tokens):
        n = self.cluster_size.sum()
        smoothed = (self.cluster_size + self.eps) / (n + num_tokens * self.eps) * n
        self.weight = self.embed_avg / smoothed[:, None]


if __name__ == "__main__":
    key = jax.random.PRNGKey(0)
    k_w, k_id = jax.random.split(key)

    num_tokens = 32
    codebook_dim = 128
    B, H, W = 2, 16, 16

    module = EmbeddingEMA(num_tokens, codebook_dim, key=k_w)
    embed_id = jax.random.randint(k_id, (B, H, W), 0, num_tokens, dtype=jnp.int32)

    out = jax.block_until_ready(module.forward(embed_id))

    # correctness check against plain JAX gather (== F.embedding semantics)
    ref = jnp.take(module.weight, embed_id, axis=0)
    assert out.shape == (B, H, W, codebook_dim)
    assert jnp.allclose(out, ref), "mismatch vs reference gather"

    print("KERNEL_OK")
</pallas_src>

<mosaic_0001>
module attributes {stable_mosaic.version = 11 : i64} {
  func.func @_onehot_kernel(%arg0: i32, %arg1: memref<512x1xi32, #tpu.memory_space<vmem>>, %arg2: memref<32x128xf32, #tpu.memory_space<vmem>>, %arg3: memref<512x128xf32, #tpu.memory_space<vmem>>) attributes {dimension_semantics = [#tpu.dimension_semantics<parallel>], iteration_bounds = array<i64: 1>, scalar_prefetch = 0 : i64, scratch_operands = 0 : i64, tpu.core_type = #tpu.core_type<tc>, window_params = [{transform_indices = @transform_0, window_bounds = array<i64: 512, 1>}, {pipeline_mode = #tpu.pipeline_mode<synchronous>, transform_indices = @transform_1, window_bounds = array<i64: 32, 128>}, {transform_indices = @transform_2, window_bounds = array<i64: 512, 128>}]} {
    %c0 = arith.constant 0 : index
    %c0_0 = arith.constant 0 : index
    %0 = vector.load %arg1[%c0, %c0_0] : memref<512x1xi32, #tpu.memory_space<vmem>>, vector<512x1xi32>
    %1 = tpu.iota {dimensions = array<i32: 1>} : vector<512x32xi32>
    %2 = vector.broadcast %0 : vector<512x1xi32> to vector<512x32xi32>
    %3 = arith.cmpi eq, %1, %2 : vector<512x32xi32>
    %4 = arith.extui %3 : vector<512x32xi1> to vector<512x32xi32>
    %5 = arith.sitofp %4 : vector<512x32xi32> to vector<512x32xf32>
    %c0_1 = arith.constant 0 : index
    %c0_2 = arith.constant 0 : index
    %6 = vector.load %arg2[%c0_1, %c0_2] : memref<32x128xf32, #tpu.memory_space<vmem>>, vector<32x128xf32>
    %cst = arith.constant dense<0.000000e+00> : vector<512x128xf32>
    %7 = tpu.matmul %5, %6, %cst {dimension_numbers = #tpu.dot_dimension_numbers<[1], [0], [0], [1], [0, 0, 1, 1], [], []>} : vector<512x32xf32>, vector<32x128xf32>, vector<512x128xf32> -> vector<512x128xf32>
    %c0_3 = arith.constant 0 : index
    %c0_4 = arith.constant 0 : index
    %8 = vector.load %arg3[%c0_3, %c0_4] : memref<512x128xf32, #tpu.memory_space<vmem>>, vector<512x128xf32>
    tpu.vector_store %arg3[%c0_3, %c0_4], %7 {strides = array<i32>} : memref<512x128xf32, #tpu.memory_space<vmem>>, vector<512x128xf32>,
    return
  }
  func.func @transform_0(%arg0: i32) -> (i32, i32) {
    %c0_i32 = arith.constant 0 : i32
    %c0_i32_0 = arith.constant 0 : i32
    return %arg0, %c0_i32 : i32, i32
  }
  func.func @transform_1(%arg0: i32) -> (i32, i32) {
    %c0_i32 = arith.constant 0 : i32
    %c0_i32_0 = arith.constant 0 : i32
    %c0_i32_1 = arith.constant 0 : i32
    return %c0_i32, %c0_i32_0 : i32, i32
  }
  func.func @transform_2(%arg0: i32) -> (i32, i32) {
    %c0_i32 = arith.constant 0 : i32
    %c0_i32_0 = arith.constant 0 : i32
    return %arg0, %c0_i32 : i32, i32
  }
}

</mosaic_0001>

<llo_original>
// kernel: tpu_custom_call.1
$region0: #{tpu_custom_call.1}
  #allocation0 [shape = 'u32[]', space=smem, size = 0x4, offset = 0x4, fixed_abs, tag = 'smem constant byte address 0x4 - core index']
  #allocation1 [shape = 'u32[144,128]{1,0:T(1,128)}', space=vmem, size = 0x12000, scoped, tag = 'internal scratch']
  %s0 = inlined_call_operand.vmem [shape: s32[512,1], index: 0, kind: input, shape index: {}]
  %s1 = inlined_call_operand.vmem [shape: f32[32,128], index: 1, kind: input, shape index: {}]
  %s2 = inlined_call_operand.hbm [shape: f32[512,128], index: 2, kind: output, shape index: {}]
  %s3 = sld [smem:[#allocation0]]
  $region18: #{tpu_custom_call.1} parent=0
    _
  %s5 = ssub.s32 1, %s3
  %s6 = scalar_select 0, %s5, %s3
  $region1: #{tpu_custom_call.1} parent=0
    #allocation2 [shape = 'u8[262144]{0}', space=vmem, size = 0x40000, scoped, tag = 'output window, operand 0, single buffered']
    #allocation3 [shape = 's32[1]{0}', space=sflag, size = 0x4, scoped, tag = 'scoped memory for tpu_custom_call.1']
    %7 = vsyncpa [#allocation3], 0
    // Predicated region
    $region2: #{tpu_custom_call.1} parent=1 // pred_check
      _
    $region3: #{tpu_custom_call.1} parent=1 // pred_check_branch
      %9 = sbr.rel (0) target = $region5
    $region4: #{tpu_custom_call.1} parent=1 // pred_region
      _
    $region5: #{tpu_custom_call.1} parent=1 // pred_fallthru
      _
    // Predicated region
    $region6: #{tpu_custom_call.1} parent=1 // pred_check
      _
    $region7: #{tpu_custom_call.1} parent=1 // pred_check_branch
      %11 = sbr.rel (0) target = $region9
    $region8: #{tpu_custom_call.1} parent=1 // pred_region
      _
    $region9: #{tpu_custom_call.1} parent=1 // pred_fallthru
      _
    %v12 = vld [vmem:[%s0] sm:$0xff]
    %v13 = vld [vmem:[%s0 + $0x8] sm:$0xff]
    %v14 = vld [vmem:[%s0 + $0x10] sm:$0xff]
    %v15 = vld [vmem:[%s0 + $0x18] sm:$0xff]
    %v16 = vld [vmem:[%s0 + $0x20] sm:$0xff]
    %v17 = vld [vmem:[%s0 + $0x28] sm:$0xff]
    %v18 = vld [vmem:[%s0 + $0x30] sm:$0xff]
    %v19 = vld [vmem:[%s0 + $0x38] sm:$0xff]
    %v20 = vld [vmem:[%s0 + $0x40] sm:$0xff]
    %v21 = vld [vmem:[%s0 + $0x48] sm:$0xff]
    %v22 = vld [vmem:[%s0 + $0x50] sm:$0xff]
    %v23 = vld [vmem:[%s0 + $0x58] sm:$0xff]
    %v24 = vld [vmem:[%s0 + $0x60] sm:$0xff]
    %v25 = vld [vmem:[%s0 + $0x68] sm:$0xff]
    %v26 = vld [vmem:[%s0 + $0x70] sm:$0xff]
    %v27 = vld [vmem:[%s0 + $0x78] sm:$0xff]
    %v28 = vld [vmem:[%s0 + $0x80] sm:$0xff]
    %v29 = vld [vmem:[%s0 + $0x88] sm:$0xff]
    %v30 = vld [vmem:[%s0 + $0x90] sm:$0xff]
    %v31 = vld [vmem:[%s0 + $0x98] sm:$0xff]
    %v32 = vld [vmem:[%s0 + $0xa0] sm:$0xff]
    %v33 = vld [vmem:[%s0 + $0xa8] sm:$0xff]
    %v34 = vld [vmem:[%s0 + $0xb0] sm:$0xff]
    %v35 = vld [vmem:[%s0 + $0xb8] sm:$0xff]
    %v36 = vld [vmem:[%s0 + $0xc0] sm:$0xff]
    %v37 = vld [vmem:[%s0 + $0xc8] sm:$0xff]
    %v38 = vld [vmem:[%s0 + $0xd0] sm:$0xff]
    %v39 = vld [vmem:[%s0 + $0xd8] sm:$0xff]
    %v40 = vld [vmem:[%s0 + $0xe0] sm:$0xff]
    %v41 = vld [vmem:[%s0 + $0xe8] sm:$0xff]
    %v42 = vld [vmem:[%s0 + $0xf0] sm:$0xff]
    %v43 = vld [vmem:[%s0 + $0xf8] sm:$0xff]
    %v44 = vld [vmem:[%s0 + $0x100] sm:$0xff]
    %v45 = vld [vmem:[%s0 + $0x108] sm:$0xff]
    %v46 = vld [vmem:[%s0 + $0x110] sm:$0xff]
    %v47 = vld [vmem:[%s0 + $0x118] sm:$0xff]
    %v48 = vld [vmem:[%s0 + $0x120] sm:$0xff]
    %v49 = vld [vmem:[%s0 + $0x128] sm:$0xff]
    %v50 = vld [vmem:[%s0 + $0x130] sm:$0xff]
    %v51 = vld [vmem:[%s0 + $0x138] sm:$0xff]
    %v52 = vld [vmem:[%s0 + $0x140] sm:$0xff]
    %v53 = vld [vmem:[%s0 + $0x148] sm:$0xff]
    %v54 = vld [vmem:[%s0 + $0x150] sm:$0xff]
    %v55 = vld [vmem:[%s0 + $0x158] sm:$0xff]
    %v56 = vld [vmem:[%s0 + $0x160] sm:$0xff]
    %v57 = vld [vmem:[%s0 + $0x168] sm:$0xff]
    %v58 = vld [vmem:[%s0 + $0x170] sm:$0xff]
    %v59 = vld [vmem:[%s0 + $0x178] sm:$0xff]
    %v60 = vld [vmem:[%s0 + $0x180] sm:$0xff]
    %v61 = vld [vmem:[%s0 + $0x188] sm:$0xff]
    %v62 = vld [vmem:[%s0 + $0x190] sm:$0xff]
    %v63 = vld [vmem:[%s0 + $0x198] sm:$0xff]
    %v64 = vld [vmem:[%s0 + $0x1a0] sm:$0xff]
    %v65 = vld [vmem:[%s0 + $0x1a8] sm:$0xff]
    %v66 = vld [vmem:[%s0 + $0x1b0] sm:$0xff]
    %v67 = vld [vmem:[%s0 + $0x1b8] sm:$0xff]
    %v68 = vld [vmem:[%s0 + $0x1c0] sm:$0xff]
    %v69 = vld [vmem:[%s0 + $0x1c8] sm:$0xff]
    %v70 = vld [vmem:[%s0 + $0x1d0] sm:$0xff]
    %v71 = vld [vmem:[%s0 + $0x1d8] sm:$0xff]
    %v72 = vld [vmem:[%s0 + $0x1e0] sm:$0xff]
    %v73 = vld [vmem:[%s0 + $0x1e8] sm:$0xff]
    %v74 = vld [vmem:[%s0 + $0x1f0] sm:$0xff]
    %v75 = vld [vmem:[%s0 + $0x1f8] sm:$0xff]
    %v76 = vlaneseq
    %v77 = vand.u32 %v76, 127
    %78 = vset.pattern.permute.xlu0 0
    %79 = vperm.xlu0 %78, %v12
    %v80 = vpop.permute.xlu0 %79
    %81 = vset.pattern.permute.xlu0 0
    %82 = vperm.xlu0 %81, %v13
    %v83 = vpop.permute.xlu0 %82
    %84 = vset.pattern.permute.xlu0 0
    %85 = vperm.xlu0 %84, %v14
    %v86 = vpop.permute.xlu0 %85
    %87 = vset.pattern.permute.xlu0 0
    %88 = vperm.xlu0 %87, %v15
    %v89 = vpop.permute.xlu0 %88
    %90 = vset.pattern.permute.xlu0 0
    %91 = vperm.xlu0 %90, %v16
    %v92 = vpop.permute.xlu0 %91
    %93 = vset.pattern.permute.xlu0 0
    %94 = vperm.xlu0 %93, %v17
    %v95 = vpop.permute.xlu0 %94
    %96 = vset.pattern.permute.xlu0 0
    %97 = vperm.xlu0 %96, %v18
    %v98 = vpop.permute.xlu0 %97
    %99 = vset.pattern.permute.xlu0 0
    %100 = vperm.xlu0 %99, %v19
    %v101 = vpop.permute.xlu0 %100
    %102 = vset.pattern.permute.xlu0 0
    %103 = vperm.xlu0 %102, %v20
    %v104 = vpop.permute.xlu0 %103
    %105 = vset.pattern.permute.xlu0 0
    %106 = vperm.xlu0 %105, %v21
    %v107 = vpop.permute.xlu0 %106
    %108 = vset.pattern.permute.xlu0 0
    %109 = vperm.xlu0 %108, %v22
    %v110 = vpop.permute.xlu0 %109
    %111 = vset.pattern.permute.xlu0 0
    %112 = vperm.xlu0 %111, %v23
    %v113 = vpop.permute.xlu0 %112
    %114 = vset.pattern.permute.xlu0 0
    %115 = vperm.xlu0 %114, %v24
    %v116 = vpop.permute.xlu0 %115
    %117 = vset.pattern.permute.xlu0 0
    %118 = vperm.xlu0 %117, %v25
    %v119 = vpop.permute.xlu0 %118
    %120 = vset.pattern.permute.xlu0 0
    %121 = vperm.xlu0 %120, %v26
    %v122 = vpop.permute.xlu0 %121
    %123 = vset.pattern.permute.xlu0 0
    %124 = vperm.xlu0 %123, %v27
    %v125 = vpop.permute.xlu0 %124
    %126 = vset.pattern.permute.xlu0 0
    %127 = vperm.xlu0 %126, %v28
    %v128 = vpop.permute.xlu0 %127
    %129 = vset.pattern.permute.xlu0 0
    %130 = vperm.xlu0 %129, %v29
    %v131 = vpop.permute.xlu0 %130
    %132 = vset.pattern.permute.xlu0 0
    %133 = vperm.xlu0 %132, %v30
    %v134 = vpop.permute.xlu0 %133
    %135 = vset.pattern.permute.xlu0 0
    %136 = vperm.xlu0 %135, %v31
    %v137 = vpop.permute.xlu0 %136
    %138 = vset.pattern.permute.xlu0 0
    %139 = vperm.xlu0 %138, %v32
    %v140 = vpop.permute.xlu0 %139
    %141 = vset.pattern.permute.xlu0 0
    %142 = vperm.xlu0 %141, %v33
    %v143 = vpop.permute.xlu0 %142
    %144 = vset.pattern.permute.xlu0 0
    %145 = vperm.xlu0 %144, %v34
    %v146 = vpop.permute.xlu0 %145
    %147 = vset.pattern.permute.xlu0 0
    %148 = vperm.xlu0 %147, %v35
    %v149 = vpop.permute.xlu0 %148
    %150 = vset.pattern.permute.xlu0 0
    %151 = vperm.xlu0 %150, %v36
    %v152 = vpop.permute.xlu0 %151
    %153 = vset.pattern.permute.xlu0 0
    %154 = vperm.xlu0 %153, %v37
    %v155 = vpop.permute.xlu0 %154
    %156 = vset.pattern.permute.xlu0 0
    %157 = vperm.xlu0 %156, %v38
    %v158 = vpop.permute.xlu0 %157
    %159 = vset.pattern.permute.xlu0 0
    %160 = vperm.xlu0 %159, %v39
    %v161 = vpop.permute.xlu0 %160
    %162 = vset.pattern.permute.xlu0 0
    %163 = vperm.xlu0 %162, %v40
    %v164 = vpop.permute.xlu0 %163
    %165 = vset.pattern.permute.xlu0 0
    %166 = vperm.xlu0 %165, %v41
    %v167 = vpop.permute.xlu0 %166
    %168 = vset.pattern.permute.xlu0 0
    %169 = vperm.xlu0 %168, %v42
    %v170 = vpop.permute.xlu0 %169
    %171 = vset.pattern.permute.xlu0 0
    %172 = vperm.xlu0 %171, %v43
    %v173 = vpop.permute.xlu0 %172
    %174 = vset.pattern.permute.xlu0 0
    %175 = vperm.xlu0 %174, %v44
    %v176 = vpop.permute.xlu0 %175
    %177 = vset.pattern.permute.xlu0 0
    %178 = vperm.xlu0 %177, %v45
    %v179 = vpop.permute.xlu0 %178
    %180 = vset.pattern.permute.xlu0 0
    %181 = vperm.xlu0 %180, %v46
    %v182 = vpop.permute.xlu0 %181
    %183 = vset.pattern.permute.xlu0 0
    %184 = vperm.xlu0 %183, %v47
    %v185 = vpop.permute.xlu0 %184
    %186 = vset.pattern.permute.xlu0 0
    %187 = vperm.xlu0 %186, %v48
    %v188 = vpop.permute.xlu0 %187
    %189 = vset.pattern.permute.xlu0 0
    %190 = vperm.xlu0 %189, %v49
    %v191 = vpop.permute.xlu0 %190
    %192 = vset.pattern.permute.xlu0 0
    %193 = vperm.xlu0 %192, %v50
    %v194 = vpop.permute.xlu0 %193
    %195 = vset.pattern.permute.xlu0 0
    %196 = vperm.xlu0 %195, %v51
    %v197 = vpop.permute.xlu0 %196
    %198 = vset.pattern.permute.xlu0 0
    %199 = vperm.xlu0 %198, %v52
    %v200 = vpop.permute.xlu0 %199
    %201 = vset.pattern.permute.xlu0 0
    %202 = vperm.xlu0 %201, %v53
    %v203 = vpop.permute.xlu0 %202
    %204 = vset.pattern.permute.xlu0 0
    %205 = vperm.xlu0 %204, %v54
    %v206 = vpop.permute.xlu0 %205
    %207 = vset.pattern.permute.xlu0 0
    %208 = vperm.xlu0 %207, %v55
    %v209 = vpop.permute.xlu0 %208
    %210 = vset.pattern.permute.xlu0 0
    %211 = vperm.xlu0 %210, %v56
    %v212 = vpop.permute.xlu0 %211
    %213 = vset.pattern.permute.xlu0 0
    %214 = vperm.xlu0 %213, %v57
    %v215 = vpop.permute.xlu0 %214
    %216 = vset.pattern.permute.xlu0 0
    %217 = vperm.xlu0 %216, %v58
    %v218 = vpop.permute.xlu0 %217
    %219 = vset.pattern.permute.xlu0 0
    %220 = vperm.xlu0 %219, %v59
    %v221 = vpop.permute.xlu0 %220
    %222 = vset.pattern.permute.xlu0 0
    %223 = vperm.xlu0 %222, %v60
    %v224 = vpop.permute.xlu0 %223
    %225 = vset.pattern.permute.xlu0 0
    %226 = vperm.xlu0 %225, %v61
    %v227 = vpop.permute.xlu0 %226
    %228 = vset.pattern.permute.xlu0 0
    %229 = vperm.xlu0 %228, %v62
    %v230 = vpop.permute.xlu0 %229
    %231 = vset.pattern.permute.xlu0 0
    %232 = vperm.xlu0 %231, %v63
    %v233 = vpop.permute.xlu0 %232
    %234 = vset.pattern.permute.xlu0 0
    %235 = vperm.xlu0 %234, %v64
    %v236 = vpop.permute.xlu0 %235
    %237 = vset.pattern.permute.xlu0 0
    %238 = vperm.xlu0 %237, %v65
    %v239 = vpop.permute.xlu0 %238
    %240 = vset.pattern.permute.xlu0 0
    %241 = vperm.xlu0 %240, %v66
    %v242 = vpop.permute.xlu0 %241
    %243 = vset.pattern.permute.xlu0 0
    %244 = vperm.xlu0 %243, %v67
    %v245 = vpop.permute.xlu0 %244
    %246 = vset.pattern.permute.xlu0 0
    %247 = vperm.xlu0 %246, %v68
    %v248 = vpop.permute.xlu0 %247
    %249 = vset.pattern.permute.xlu0 0
    %250 = vperm.xlu0 %249, %v69
    %v251 = vpop.permute.xlu0 %250
    %252 = vset.pattern.permute.xlu0 0
    %253 = vperm.xlu0 %252, %v70
    %v254 = vpop.permute.xlu0 %253
    %255 = vset.pattern.permute.xlu0 0
    %256 = vperm.xlu0 %255, %v71
    %v257 = vpop.permute.xlu0 %256
    %258 = vset.pattern.permute.xlu0 0
    %259 = vperm.xlu0 %258, %v72
    %v260 = vpop.permute.xlu0 %259
    %261 = vset.pattern.permute.xlu0 0
    %262 = vperm.xlu0 %261, %v73
    %v263 = vpop.permute.xlu0 %262
    %264 = vset.pattern.permute.xlu0 0
    %265 = vperm.xlu0 %264, %v74
    %v266 = vpop.permute.xlu0 %265
    %267 = vset.pattern.permute.xlu0 0
    %268 = vperm.xlu0 %267, %v75
    %v269 = vpop.permute.xlu0 %268
    %vm270 = vcmp.eq.s32.totalorder %v77, %v80
    %vm271 = vcmp.eq.s32.totalorder %v77, %v83
    %vm272 = vcmp.eq.s32.totalorder %v77, %v86
    %vm273 = vcmp.eq.s32.totalorder %v77, %v89
    %vm274 = vcmp.eq.s32.totalorder %v77, %v92
    %vm275 = vcmp.eq.s32.totalorder %v77, %v95
    %vm276 = vcmp.eq.s32.totalorder %v77, %v98
    %vm277 = vcmp.eq.s32.totalorder %v77, %v101
    %vm278 = vcmp.eq.s32.totalorder %v77, %v104
    %vm279 = vcmp.eq.s32.totalorder %v77, %v107
    %vm280 = vcmp.eq.s32.totalorder %v77, %v110
    %vm281 = vcmp.eq.s32.totalorder %v77, %v113
    %vm282 = vcmp.eq.s32.totalorder %v77, %v116
    %vm283 = vcmp.eq.s32.totalorder %v77, %v119
    %vm284 = vcmp.eq.s32.totalorder %v77, %v122
    %vm285 = vcmp.eq.s32.totalorder %v77, %v125
    %vm286 = vcmp.eq.s32.totalorder %v77, %v128
    %vm287 = vcmp.eq.s32.totalorder %v77, %v131
    %vm288 = vcmp.eq.s32.totalorder %v77, %v134
    %vm289 = vcmp.eq.s32.totalorder %v77, %v137
    %vm290 = vcmp.eq.s32.totalorder %v77, %v140
    %vm291 = vcmp.eq.s32.totalorder %v77, %v143
    %vm292 = vcmp.eq.s32.totalorder %v77, %v146
    %vm293 = vcmp.eq.s32.totalorder %v77, %v149
    %vm294 = vcmp.eq.s32.totalorder %v77, %v152
    %vm295 = vcmp.eq.s32.totalorder %v77, %v155
    %vm296 = vcmp.eq.s32.totalorder %v77, %v158
    %vm297 = vcmp.eq.s32.totalorder %v77, %v161
    %vm298 = vcmp.eq.s32.totalorder %v77, %v164
    %vm299 = vcmp.eq.s32.totalorder %v77, %v167
    %vm300 = vcmp.eq.s32.totalorder %v77, %v170
    %vm301 = vcmp.eq.s32.totalorder %v77, %v173
    %vm302 = vcmp.eq.s32.totalorder %v77, %v176
    %vm303 = vcmp.eq.s32.totalorder %v77, %v179
    %vm304 = vcmp.eq.s32.totalorder %v77, %v182
    %vm305 = vcmp.eq.s32.totalorder %v77, %v185
    %vm306 = vcmp.eq.s32.totalorder %v77, %v188
    %vm307 = vcmp.eq.s32.totalorder %v77, %v191
    %vm308 = vcmp.eq.s32.totalorder %v77, %v194
    %vm309 = vcmp.eq.s32.totalorder %v77, %v197
    %vm310 = vcmp.eq.s32.totalorder %v77, %v200
    %vm311 = vcmp.eq.s32.totalorder %v77, %v203
    %vm312 = vcmp.eq.s32.totalorder %v77, %v206
    %vm313 = vcmp.eq.s32.totalorder %v77, %v209
    %vm314 = vcmp.eq.s32.totalorder %v77, %v212
    %vm315 = vcmp.eq.s32.totalorder %v77, %v215
    %vm316 = vcmp.eq.s32.totalorder %v77, %v218
    %vm317 = vcmp.eq.s32.totalorder %v77, %v221
    %vm318 = vcmp.eq.s32.totalorder %v77, %v224
    %vm319 = vcmp.eq.s32.totalorder %v77, %v227
    %vm320 = vcmp.eq.s32.totalorder %v77, %v230
    %vm321 = vcmp.eq.s32.totalorder %v77, %v233
    %vm322 = vcmp.eq.s32.totalorder %v77, %v236
    %vm323 = vcmp.eq.s32.totalorder %v77, %v239
    %vm324 = vcmp.eq.s32.totalorder %v77, %v242
    %vm325 = vcmp.eq.s32.totalorder %v77, %v245
    %vm326 = vcmp.eq.s32.totalorder %v77, %v248
    %vm327 = vcmp.eq.s32.totalorder %v77, %v251
    %vm328 = vcmp.eq.s32.totalorder %v77, %v254
    %vm329 = vcmp.eq.s32.totalorder %v77, %v257
    %vm330 = vcmp.eq.s32.totalorder %v77, %v260
    %vm331 = vcmp.eq.s32.totalorder %v77, %v263
    %vm332 = vcmp.eq.s32.totalorder %v77, %v266
    %vm333 = vcmp.eq.s32.totalorder %v77, %v269
    %v334 = vsel %vm270, 1, 0
    %v335 = vsel %vm271, 1, 0
    %v336 = vsel %vm272, 1, 0
    %v337 = vsel %vm273, 1, 0
    %v338 = vsel %vm274, 1, 0
    %v339 = vsel %vm275, 1, 0
    %v340 = vsel %vm276, 1, 0
    %v341 = vsel %vm277, 1, 0
    %v342 = vsel %vm278, 1, 0
    %v343 = vsel %vm279, 1, 0
    %v344 = vsel %vm280, 1, 0
    %v345 = vsel %vm281, 1, 0
    %v346 = vsel %vm282, 1, 0
    %v347 = vsel %vm283, 1, 0
    %v348 = vsel %vm284, 1, 0
    %v349 = vsel %vm285, 1, 0
    %v350 = vsel %vm286, 1, 0
    %v351 = vsel %vm287, 1, 0
    %v352 = vsel %vm288, 1, 0
    %v353 = vsel %vm289, 1, 0
    %v354 = vsel %vm290, 1, 0
    %v355 = vsel %vm291, 1, 0
    %v356 = vsel %vm292, 1, 0
    %v357 = vsel %vm293, 1, 0
    %v358 = vsel %vm294, 1, 0
    %v359 = vsel %vm295, 1, 0
    %v360 = vsel %vm296, 1, 0
    %v361 = vsel %vm297, 1, 0
    %v362 = vsel %vm298, 1, 0
    %v363 = vsel %vm299, 1, 0
    %v364 = vsel %vm300, 1, 0
    %v365 = vsel %vm301, 1, 0
    %v366 = vsel %vm302, 1, 0
    %v367 = vsel %vm303, 1, 0
    %v368 = vsel %vm304, 1, 0
    %v369 = vsel %vm305, 1, 0
    %v370 = vsel %vm306, 1, 0
    %v371 = vsel %vm307, 1, 0
    %v372 = vsel %vm308, 1, 0
    %v373 = vsel %vm309, 1, 0
    %v374 = vsel %vm310, 1, 0
    %v375 = vsel %vm311, 1, 0
    %v376 = vsel %vm312, 1, 0
    %v377 = vsel %vm313, 1, 0
    %v378 = vsel %vm314, 1, 0
    %v379 = vsel %vm315, 1, 0
    %v380 = vsel %vm316, 1, 0
    %v381 = vsel %vm317, 1, 0
    %v382 = vsel %vm318, 1, 0
    %v383 = vsel %vm319, 1, 0
    %v384 = vsel %vm320, 1, 0
    %v385 = vsel %vm321, 1, 0
    %v386 = vsel %vm322, 1, 0
    %v387 = vsel %vm323, 1, 0
    %v388 = vsel %vm324, 1, 0
    %v389 = vsel %vm325, 1, 0
    %v390 = vsel %vm326, 1, 0
    %v391 = vsel %vm327, 1, 0
    %v392 = vsel %vm328, 1, 0
    %v393 = vsel %vm329, 1, 0
    %v394 = vsel %vm330, 1, 0
    %v395 = vsel %vm331, 1, 0
    %v396 = vsel %vm332, 1, 0
    %v397 = vsel %vm333, 1, 0
    %v398 = vcvt.s32.f32 %v334
    %v399 = vcvt.s32.f32 %v335
    %v400 = vcvt.s32.f32 %v336
    %v401 = vcvt.s32.f32 %v337
    %v402 = vcvt.s32.f32 %v338
    %v403 = vcvt.s32.f32 %v339
    %v404 = vcvt.s32.f32 %v340
    %v405 = vcvt.s32.f32 %v341
    %v406 = vcvt.s32.f32 %v342
    %v407 = vcvt.s32.f32 %v343
    %v408 = vcvt.s32.f32 %v344
    %v409 = vcvt.s32.f32 %v345
    %v410 = vcvt.s32.f32 %v346
    %v411 = vcvt.s32.f32 %v347
    %v412 = vcvt.s32.f32 %v348
    %v413 = vcvt.s32.f32 %v349
    %v414 = vcvt.s32.f32 %v350
    %v415 = vcvt.s32.f32 %v351
    %v416 = vcvt.s32.f32 %v352
    %v417 = vcvt.s32.f32 %v353
    %v418 = vcvt.s32.f32 %v354
    %v419 = vcvt.s32.f32 %v355
    %v420 = vcvt.s32.f32 %v356
    %v421 = vcvt.s32.f32 %v357
    %v422 = vcvt.s32.f32 %v358
    %v423 = vcvt.s32.f32 %v359
    %v424 = vcvt.s32.f32 %v360
    %v425 = vcvt.s32.f32 %v361
    %v426 = vcvt.s32.f32 %v362
    %v427 = vcvt.s32.f32 %v363
    %v428 = vcvt.s32.f32 %v364
    %v429 = vcvt.s32.f32 %v365
    %v430 = vcvt.s32.f32 %v366
    %v431 = vcvt.s32.f32 %v367
    %v432 = vcvt.s32.f32 %v368
    %v433 = vcvt.s32.f32 %v369
    %v434 = vcvt.s32.f32 %v370
    %v435 = vcvt.s32.f32 %v371
    %v436 = vcvt.s32.f32 %v372
    %v437 = vcvt.s32.f32 %v373
    %v438 = vcvt.s32.f32 %v374
    %v439 = vcvt.s32.f32 %v375
    %v440 = vcvt.s32.f32 %v376
    %v441 = vcvt.s32.f32 %v377
    %v442 = vcvt.s32.f32 %v378
    %v443 = vcvt.s32.f32 %v379
    %v444 = vcvt.s32.f32 %v380
    %v445 = vcvt.s32.f32 %v381
    %v446 = vcvt.s32.f32 %v382
    %v447 = vcvt.s32.f32 %v383
    %v448 = vcvt.s32.f32 %v384
    %v449 = vcvt.s32.f32 %v385
    %v450 = vcvt.s32.f32 %v386
    %v451 = vcvt.s32.f32 %v387
    %v452 = vcvt.s32.f32 %v388
    %v453 = vcvt.s32.f32 %v389
    %v454 = vcvt.s32.f32 %v390
    %v455 = vcvt.s32.f32 %v391
    %v456 = vcvt.s32.f32 %v392
    %v457 = vcvt.s32.f32 %v393
    %v458 = vcvt.s32.f32 %v394
    %v459 = vcvt.s32.f32 %v395
    %v460 = vcvt.s32.f32 %v396
    %v461 = vcvt.s32.f32 %v397
    %v462 = vld [vmem:[%s1] sm:$0xff]
    %v463 = vld [vmem:[%s1 + $0x8] sm:$0xff]
    %v464 = vld [vmem:[%s1 + $0x10] sm:$0xff]
    %v465 = vld [vmem:[%s1 + $0x18] sm:$0xff]
    %vm466 = vcmask 261120
    %v468 = vsel %vm466, %v398, 0
    %v471 = vsel %vm466, %v399, 0
    %v474 = vsel %vm466, %v400, 0
    %v477 = vsel %vm466, %v401, 0
    %v480 = vsel %vm466, %v402, 0
    %v483 = vsel %vm466, %v403, 0
    %v486 = vsel %vm466, %v404, 0
    %v489 = vsel %vm466, %v405, 0
    %v492 = vsel %vm466, %v406, 0
    %v495 = vsel %vm466, %v407, 0
    %v498 = vsel %vm466, %v408, 0
    %v501 = vsel %vm466, %v409, 0
    %v504 = vsel %vm466, %v410, 0
    %v507 = vsel %vm466, %v411, 0
    %v510 = vsel %vm466, %v412, 0
    %v513 = vsel %vm466, %v413, 0
    %v516 = vsel %vm466, %v414, 0
    %v519 = vsel %vm466, %v415, 0
    %v522 = vsel %vm466, %v416, 0
    %v525 = vsel %vm466, %v417, 0
    %v528 = vsel %vm466, %v418, 0
    %v531 = vsel %vm466, %v419, 0
    %v534 = vsel %vm466, %v420, 0
    %v537 = vsel %vm466, %v421, 0
    %v540 = vsel %vm466, %v422, 0
    %v543 = vsel %vm466, %v423, 0
    %v546 = vsel %vm466, %v424, 0
    %v549 = vsel %vm466, %v425, 0
    %v552 = vsel %vm466, %v426, 0
    %v555 = vsel %vm466, %v427, 0
    %v558 = vsel %vm466, %v428, 0
    %v561 = vsel %vm466, %v429, 0
    %v564 = vsel %vm466, %v430, 0
    %v567 = vsel %vm466, %v431, 0
    %v570 = vsel %vm466, %v432, 0
    %v573 = vsel %vm466, %v433, 0
    %v576 = vsel %vm466, %v434, 0
    %v579 = vsel %vm466, %v435, 0
    %v582 = vsel %vm466, %v436, 0
    %v585 = vsel %vm466, %v437, 0
    %v588 = vsel %vm466, %v438, 0
    %v591 = vsel %vm466, %v439, 0
    %v594 = vsel %vm466, %v440, 0
    %v597 = vsel %vm466, %v441, 0
    %v600 = vsel %vm466, %v442, 0
    %v603 = vsel %vm466, %v443, 0
    %v606 = vsel %vm466, %v444, 0
    %v609 = vsel %vm466, %v445, 0
    %v612 = vsel %vm466, %v446, 0
    %v615 = vsel %vm466, %v447, 0
    %v618 = vsel %vm466, %v448, 0
    %v621 = vsel %vm466, %v449, 0
    %v624 = vsel %vm466, %v450, 0
    %v627 = vsel %vm466, %v451, 0
    %v630 = vsel %vm466, %v452, 0
    %v633 = vsel %vm466, %v453, 0
    %v636 = vsel %vm466, %v454, 0
    %v639 = vsel %vm466, %v455, 0
    %v642 = vsel %vm466, %v456, 0
    %v645 = vsel %vm466, %v457, 0
    %v648 = vsel %vm466, %v458, 0
    %v651 = vsel %vm466, %v459, 0
    %v654 = vsel %vm466, %v460, 0
    %v657 = vsel %vm466, %v461, 0
    %659 = vmatprep.subr.mxu0 0.0
    %660 = vmatpush1.msra.mxu0 0.0
    %661 = vmatprep.subr.mxu0 0.0
    %662 = vmatpush1.msra.mxu0 0.0
    %663 = vmatprep.subr.mxu0 0.0
    %664 = vmatpush1.msra.mxu0 0.0
    %665 = vmatprep.subr.mxu0 0.0
    %666 = vmatpush1.msra.mxu0 0.0
    %667 = vmatprep.subr.mxu0 0.0
    %668 = vmatpush1.msra.mxu0 0.0
    %669 = vmatprep.subr.mxu0 0.0
    %670 = vmatpush1.msra.mxu0 0.0
    %671 = vmatprep.subr.mxu0 0.0
    %672 = vmatpush1.msra.mxu0 0.0
    %673 = vmatprep.subr.mxu0 0.0
    %674 = vmatpush1.msra.mxu0 0.0
    %675 = vmatprep.subr.mxu0 0.0
    %676 = vmatpush1.msra.mxu0 0.0
    %677 = vmatprep.subr.mxu0 0.0
    %678 = vmatpush1.msra.mxu0 0.0
    %679 = vmatprep.subr.mxu0 0.0
    %680 = vmatpush1.msra.mxu0 0.0
    %681 = vmatprep.subr.mxu0 0.0
    %682 = vmatpush1.msra.mxu0 0.0
    %683 = vmatprep.subr.mxu0 0.0
    %684 = vmatpush1.msra.mxu0 %v465
    %685 = vmatprep.subr.mxu0 0.0
    %686 = vmatpush1.msra.mxu0 %v464
    %687 = vmatprep.subr.mxu0 0.0
    %688 = vmatpush1.msra.mxu0 %v463
    %689 = vmatprep.subr.mxu0 0.0
    %690 = vmatpush1.msra.mxu0 %v462
    %691 = vmatprep.subr.mxu0 0.0
    %692 = vmatpush2.msra.mxu0 0.0
    %693 = vmatprep.subr.mxu0 0.0
    %694 = vmatpush2.msra.mxu0 0.0
    %695 = vmatprep.subr.mxu0 0.0
    %696 = vmatpush2.msra.mxu0 0.0
    %697 = vmatprep.subr.mxu0 0.0
    %698 = vmatpush2.msra.mxu0 0.0
    %699 = vmatprep.subr.mxu0 0.0
    %700 = vmatpush2.msra.mxu0 0.0
    %701 = vmatprep.subr.mxu0 0.0
    %702 = vmatpush2.msra.mxu0 0.0
    %703 = vmatprep.subr.mxu0 0.0
    %704 = vmatpush2.msra.mxu0 0.0
    %705 = vmatprep.subr.mxu0 0.0
    %706 = vmatpush2.msra.mxu0 0.0
    %707 = vmatprep.subr.mxu0 0.0
    %708 = vmatpush2.msra.mxu0 0.0
    %709 = vmatprep.subr.mxu0 0.0
    %710 = vmatpush2.msra.mxu0 0.0
    %711 = vmatprep.subr.mxu0 0.0
    %712 = vmatpush2.msra.mxu0 0.0
    %713 = vmatprep.subr.mxu0 0.0
    %714 = vmatpush2.msra.mxu0 0.0
    %715 = vmatprep.subr.mxu0 0.0
    %716 = vmatpush2.msra.mxu0 0.0
    %717 = vmatprep.subr.mxu0 0.0
    %718 = vmatpush2.msra.mxu0 0.0
    %719 = vmatprep.subr.mxu0 0.0
    %720 = vmatpush2.msra.mxu0 0.0
    %721 = vmatprep.subr.mxu0 0.0
    %722 = vmatpush2.msra.mxu0 0.0
    %723 = vmatprep.mubr.f32.mxu0 0.0
    %724 = vmatmul.mubr.f32.gmra.mxu0 %v468
    %v725 = vpop.f32.mrf.mxu0
    %v726 = vadd.f32 0.0, %v725
    %v727 = vpop.f32.mrf.mxu0
    %728 = vmatprep.mubr.f32.mxu0 0.0
    %729 = vmatmul.mubr.f32.gmra.mxu0 %v471
    %v730 = vpop.f32.mrf.mxu0
    %v731 = vadd.f32 0.0, %v730
    %v732 = vpop.f32.mrf.mxu0
    %733 = vmatprep.mubr.f32.mxu0 0.0
    %734 = vmatmul.mubr.f32.gmra.mxu0 %v474
    %v735 = vpop.f32.mrf.mxu0
    %v736 = vadd.f32 0.0, %v735
    %v737 = vpop.f32.mrf.mxu0
    %738 = vmatprep.mubr.f32.mxu0 0.0
    %739 = vmatmul.mubr.f32.gmra.mxu0 %v477
    %v740 = vpop.f32.mrf.mxu0
    %v741 = vadd.f32 0.0, %v740
    %v742 = vpop.f32.mrf.mxu0
    %743 = vmatprep.mubr.f32.mxu0 0.0
    %744 = vmatmul.mubr.f32.gmra.mxu0 %v480
    %v745 = vpop.f32.mrf.mxu0
    %v746 = vadd.f32 0.0, %v745
    %v747 = vpop.f32.mrf.mxu0
    %748 = vmatprep.mubr.f32.mxu0 0.0
    %749 = vmatmul.mubr.f32.gmra.mxu0 %v483
    %v750 = vpop.f32.mrf.mxu0
    %v751 = vadd.f32 0.0, %v750
    %v752 = vpop.f32.mrf.mxu0
    %753 = vmatprep.mubr.f32.mxu0 0.0
    %754 = vmatmul.mubr.f32.gmra.mxu0 %v486
    %v755 = vpop.f32.mrf.mxu0
    %v756 = vadd.f32 0.0, %v755
    %v757 = vpop.f32.mrf.mxu0
    %758 = vmatprep.mubr.f32.mxu0 0.0
    %759 = vmatmul.mubr.f32.gmra.mxu0 %v489
    %v760 = vpop.f32.mrf.mxu0
    %v761 = vadd.f32 0.0, %v760
    %v762 = vpop.f32.mrf.mxu0
    %763 = vmatprep.mubr.f32.mxu0 0.0
    %764 = vmatmul.mubr.f32.gmra.mxu0 %v492
    %v765 = vpop.f32.mrf.mxu0
    %v766 = vadd.f32 0.0, %v765
    %v767 = vpop.f32.mrf.mxu0
    %768 = vmatprep.mubr.f32.mxu0 0.0
    %769 = vmatmul.mubr.f32.gmra.mxu0 %v495
    %v770 = vpop.f32.mrf.mxu0
    %v771 = vadd.f32 0.0, %v770
    %v772 = vpop.f32.mrf.mxu0
    %773 = vmatprep.mubr.f32.mxu0 0.0
    %774 = vmatmul.mubr.f32.gmra.mxu0 %v498
    %v775 = vpop.f32.mrf.mxu0
    %v776 = vadd.f32 0.0, %v775
    %v777 = vpop.f32.mrf.mxu0
    %778 = vmatprep.mubr.f32.mxu0 0.0
    %779 = vmatmul.mubr.f32.gmra.mxu0 %v501
    %v780 = vpop.f32.mrf.mxu0
    %v781 = vadd.f32 0.0, %v780
    %v782 = vpop.f32.mrf.mxu0
    %783 = vmatprep.mubr.f32.mxu0 0.0
    %784 = vmatmul.mubr.f32.gmra.mxu0 %v504
    %v785 = vpop.f32.mrf.mxu0
    %v786 = vadd.f32 0.0, %v785
    %v787 = vpop.f32.mrf.mxu0
    %788 = vmatprep.mubr.f32.mxu0 0.0
    %789 = vmatmul.mubr.f32.gmra.mxu0 %v507
    %v790 = vpop.f32.mrf.mxu0
    %v791 = vadd.f32 0.0, %v790
    %v792 = vpop.f32.mrf.mxu0
    %793 = vmatprep.mubr.f32.mxu0 0.0
    %794 = vmatmul.mubr.f32.gmra.mxu0 %v510
    %v795 = vpop.f32.mrf.mxu0
    %v796 = vadd.f32 0.0, %v795
    %v797 = vpop.f32.mrf.mxu0
    %798 = vmatprep.mubr.f32.mxu0 0.0
    %799 = vmatmul.mubr.f32.gmra.mxu0 %v513
    %v800 = vpop.f32.mrf.mxu0
    %v801 = vadd.f32 0.0, %v800
    %v802 = vpop.f32.mrf.mxu0
    %803 = vmatprep.mubr.f32.mxu0 0.0
    %804 = vmatmul.mubr.f32.gmra.mxu0 %v516
    %v805 = vpop.f32.mrf.mxu0
    %v806 = vadd.f32 0.0, %v805
    %v807 = vpop.f32.mrf.mxu0
    %808 = vmatprep.mubr.f32.mxu0 0.0
    %809 = vmatmul.mubr.f32.gmra.mxu0 %v519
    %v810 = vpop.f32.mrf.mxu0
    %v811 = vadd.f32 0.0, %v810
    %v812 = vpop.f32.mrf.mxu0
    %813 = vmatprep.mubr.f32.mxu0 0.0
    %814 = vmatmul.mubr.f32.gmra.mxu0 %v522
    %v815 = vpop.f32.mrf.mxu0
    %v816 = vadd.f32 0.0, %v815
    %v817 = vpop.f32.mrf.mxu0
    %818 = vmatprep.mubr.f32.mxu0 0.0
    %819 = vmatmul.mubr.f32.gmra.mxu0 %v525
    %v820 = vpop.f32.mrf.mxu0
    %v821 = vadd.f32 0.0, %v820
    %v822 = vpop.f32.mrf.mxu0
    %823 = vmatprep.mubr.f32.mxu0 0.0
    %824 = vmatmul.mubr.f32.gmra.mxu0 %v528
    %v825 = vpop.f32.mrf.mxu0
    %v826 = vadd.f32 0.0, %v825
    %v827 = vpop.f32.mrf.mxu0
    %828 = vmatprep.mubr.f32.mxu0 0.0
    %829 = vmatmul.mubr.f32.gmra.mxu0 %v531
    %v830 = vpop.f32.mrf.mxu0
    %v831 = vadd.f32 0.0, %v830
    %v832 = vpop.f32.mrf.mxu0
    %833 = vmatprep.mubr.f32.mxu0 0.0
    %834 = vmatmul.mubr.f32.gmra.mxu0 %v534
    %v835 = vpop.f32.mrf.mxu0
    %v836 = vadd.f32 0.0, %v835
    %v837 = vpop.f32.mrf.mxu0
    %838 = vmatprep.mubr.f32.mxu0 0.0
    %839 = vmatmul.mubr.f32.gmra.mxu0 %v537
    %v840 = vpop.f32.mrf.mxu0
    %v841 = vadd.f32 0.0, %v840
    %v842 = vpop.f32.mrf.mxu0
    %843 = vmatprep.mubr.f32.mxu0 0.0
    %844 = vmatmul.mubr.f32.gmra.mxu0 %v540
    %v845 = vpop.f32.mrf.mxu0
    %v846 = vadd.f32 0.0, %v845
    %v847 = vpop.f32.mrf.mxu0
    %848 = vmatprep.mubr.f32.mxu0 0.0
    %849 = vmatmul.mubr.f32.gmra.mxu0 %v543
    %v850 = vpop.f32.mrf.mxu0
    %v851 = vadd.f32 0.0, %v850
    %v852 = vpop.f32.mrf.mxu0
    %853 = vmatprep.mubr.f32.mxu0 0.0
    %854 = vmatmul.mubr.f32.gmra.mxu0 %v546
    %v855 = vpop.f32.mrf.mxu0
    %v856 = vadd.f32 0.0, %v855
    %v857 = vpop.f32.mrf.mxu0
    %858 = vmatprep.mubr.f32.mxu0 0.0
    %859 = vmatmul.mubr.f32.gmra.mxu0 %v549
    %v860 = vpop.f32.mrf.mxu0
    %v861 = vadd.f32 0.0, %v860
    %v862 = vpop.f32.mrf.mxu0
    %863 = vmatprep.mubr.f32.mxu0 0.0
    %864 = vmatmul.mubr.f32.gmra.mxu0 %v552
    %v865 = vpop.f32.mrf.mxu0
    %v866 = vadd.f32 0.0, %v865
    %v867 = vpop.f32.mrf.mxu0
    %868 = vmatprep.mubr.f32.mxu0 0.0
    %869 = vmatmul.mubr.f32.gmra.mxu0 %v555
    %v870 = vpop.f32.mrf.mxu0
    %v871 = vadd.f32 0.0, %v870
    %v872 = vpop.f32.mrf.mxu0
    %873 = vmatprep.mubr.f32.mxu0 0.0
    %874 = vmatmul.mubr.f32.gmra.mxu0 %v558
    %v875 = vpop.f32.mrf.mxu0
    %v876 = vadd.f32 0.0, %v875
    %v877 = vpop.f32.mrf.mxu0
    %878 = vmatprep.mubr.f32.mxu0 0.0
    %879 = vmatmul.mubr.f32.gmra.mxu0 %v561
    %v880 = vpop.f32.mrf.mxu0
    %v881 = vadd.f32 0.0, %v880
    %v882 = vpop.f32.mrf.mxu0
    %883 = vmatprep.mubr.f32.mxu0 0.0
    %884 = vmatmul.mubr.f32.gmra.mxu0 %v564
    %v885 = vpop.f32.mrf.mxu0
    %v886 = vadd.f32 0.0, %v885
    %v887 = vpop.f32.mrf.mxu0
    %888 = vmatprep.mubr.f32.mxu0 0.0
    %889 = vmatmul.mubr.f32.gmra.mxu0 %v567
    %v890 = vpop.f32.mrf.mxu0
    %v891 = vadd.f32 0.0, %v890
    %v892 = vpop.f32.mrf.mxu0
    %893 = vmatprep.mubr.f32.mxu0 0.0
    %894 = vmatmul.mubr.f32.gmra.mxu0 %v570
    %v895 = vpop.f32.mrf.mxu0
    %v896 = vadd.f32 0.0, %v895
    %v897 = vpop.f32.mrf.mxu0
    %898 = vmatprep.mubr.f32.mxu0 0.0
    %899 = vmatmul.mubr.f32.gmra.mxu0 %v573
    %v900 = vpop.f32.mrf.mxu0
    %v901 = vadd.f32 0.0, %v900
    %v902 = vpop.f32.mrf.mxu0
    %903 = vmatprep.mubr.f32.mxu0 0.0
    %904 = vmatmul.mubr.f32.gmra.mxu0 %v576
    %v905 = vpop.f32.mrf.mxu0
    %v906 = vadd.f32 0.0, %v905
    %v907 = vpop.f32.mrf.mxu0
    %908 = vmatprep.mubr.f32.mxu0 0.0
    %909 = vmatmul.mubr.f32.gmra.mxu0 %v579
    %v910 = vpop.f32.mrf.mxu0
    %v911 = vadd.f32 0.0, %v910
    %v912 = vpop.f32.mrf.mxu0
    %913 = vmatprep.mubr.f32.mxu0 0.0
    %914 = vmatmul.mubr.f32.gmra.mxu0 %v582
    %v915 = vpop.f32.mrf.mxu0
    %v916 = vadd.f32 0.0, %v915
    %v917 = vpop.f32.mrf.mxu0
    %918 = vmatprep.mubr.f32.mxu0 0.0
    %919 = vmatmul.mubr.f32.gmra.mxu0 %v585
    %v920 = vpop.f32.mrf.mxu0
    %v921 = vadd.f32 0.0, %v920
    %v922 = vpop.f32.mrf.mxu0
    %923 = vmatprep.mubr.f32.mxu0 0.0
    %924 = vmatmul.mubr.f32.gmra.mxu0 %v588
    %v925 = vpop.f32.mrf.mxu0
    %v926 = vadd.f32 0.0, %v925
    %v927 = vpop.f32.mrf.mxu0
    %928 = vmatprep.mubr.f32.mxu0 0.0
    %929 = vmatmul.mubr.f32.gmra.mxu0 %v591
    %v930 = vpop.f32.mrf.mxu0
    %v931 = vadd.f32 0.0, %v930
    %v932 = vpop.f32.mrf.mxu0
    %933 = vmatprep.mubr.f32.mxu0 0.0
    %934 = vmatmul.mubr.f32.gmra.mxu0 %v594
    %v935 = vpop.f32.mrf.mxu0
    %v936 = vadd.f32 0.0, %v935
    %v937 = vpop.f32.mrf.mxu0
    %938 = vmatprep.mubr.f32.mxu0 0.0
    %939 = vmatmul.mubr.f32.gmra.mxu0 %v597
    %v940 = vpop.f32.mrf.mxu0
    %v941 = vadd.f32 0.0, %v940
    %v942 = vpop.f32.mrf.mxu0
    %943 = vmatprep.mubr.f32.mxu0 0.0
    %944 = vmatmul.mubr.f32.gmra.mxu0 %v600
    %v945 = vpop.f32.mrf.mxu0
    %v946 = vadd.f32 0.0, %v945
    %v947 = vpop.f32.mrf.mxu0
    %948 = vmatprep.mubr.f32.mxu0 0.0
    %949 = vmatmul.mubr.f32.gmra.mxu0 %v603
    %v950 = vpop.f32.mrf.mxu0
    %v951 = vadd.f32 0.0, %v950
    %v952 = vpop.f32.mrf.mxu0
    %953 = vmatprep.mubr.f32.mxu0 0.0
    %954 = vmatmul.mubr.f32.gmra.mxu0 %v606
    %v955 = vpop.f32.mrf.mxu0
    %v956 = vadd.f32 0.0, %v955
    %v957 = vpop.f32.mrf.mxu0
    %958 = vmatprep.mubr.f32.mxu0 0.0
    %959 = vmatmul.mubr.f32.gmra.mxu0 %v609
    %v960 = vpop.f32.mrf.mxu0
    %v961 = vadd.f32 0.0, %v960
    %v962 = vpop.f32.mrf.mxu0
    %963 = vmatprep.mubr.f32.mxu0 0.0
    %964 = vmatmul.mubr.f32.gmra.mxu0 %v612
    %v965 = vpop.f32.mrf.mxu0
    %v966 = vadd.f32 0.0, %v965
    %v967 = vpop.f32.mrf.mxu0
    %968 = vmatprep.mubr.f32.mxu0 0.0
    %969 = vmatmul.mubr.f32.gmra.mxu0 %v615
    %v970 = vpop.f32.mrf.mxu0
    %v971 = vadd.f32 0.0, %v970
    %v972 = vpop.f32.mrf.mxu0
    %973 = vmatprep.mubr.f32.mxu0 0.0
    %974 = vmatmul.mubr.f32.gmra.mxu0 %v618
    %v975 = vpop.f32.mrf.mxu0
    %v976 = vadd.f32 0.0, %v975
    %v977 = vpop.f32.mrf.mxu0
    %978 = vmatprep.mubr.f32.mxu0 0.0
    %979 = vmatmul.mubr.f32.gmra.mxu0 %v621
    %v980 = vpop.f32.mrf.mxu0
    %v981 = vadd.f32 0.0, %v980
    %v982 = vpop.f32.mrf.mxu0
    %983 = vmatprep.mubr.f32.mxu0 0.0
    %984 = vmatmul.mubr.f32.gmra.mxu0 %v624
    %v985 = vpop.f32.mrf.mxu0
    %v986 = vadd.f32 0.0, %v985
    %v987 = vpop.f32.mrf.mxu0
    %988 = vmatprep.mubr.f32.mxu0 0.0
    %989 = vmatmul.mubr.f32.gmra.mxu0 %v627
    %v990 = vpop.f32.mrf.mxu0
    %v991 = vadd.f32 0.0, %v990
    %v992 = vpop.f32.mrf.mxu0
    %993 = vmatprep.mubr.f32.mxu0 0.0
    %994 = vmatmul.mubr.f32.gmra.mxu0 %v630
    %v995 = vpop.f32.mrf.mxu0
    %v996 = vadd.f32 0.0, %v995
    %v997 = vpop.f32.mrf.mxu0
    %998 = vmatprep.mubr.f32.mxu0 0.0
    %999 = vmatmul.mubr.f32.gmra.mxu0 %v633
    %v1000 = vpop.f32.mrf.mxu0
    %v1001 = vadd.f32 0.0, %v1000
    %v1002 = vpop.f32.mrf.mxu0
    %1003 = vmatprep.mubr.f32.mxu0 0.0
    %1004 = vmatmul.mubr.f32.gmra.mxu0 %v636
    %v1005 = vpop.f32.mrf.mxu0
    %v1006 = vadd.f32 0.0, %v1005
    %v1007 = vpop.f32.mrf.mxu0
    %1008 = vmatprep.mubr.f32.mxu0 0.0
    %1009 = vmatmul.mubr.f32.gmra.mxu0 %v639
    %v1010 = vpop.f32.mrf.mxu0
    %v1011 = vadd.f32 0.0, %v1010
    %v1012 = vpop.f32.mrf.mxu0
    %1013 = vmatprep.mubr.f32.mxu0 0.0
    %1014 = vmatmul.mubr.f32.gmra.mxu0 %v642
    %v1015 = vpop.f32.mrf.mxu0
    %v1016 = vadd.f32 0.0, %v1015
    %v1017 = vpop.f32.mrf.mxu0
    %1018 = vmatprep.mubr.f32.mxu0 0.0
    %1019 = vmatmul.mubr.f32.gmra.mxu0 %v645
    %v1020 = vpop.f32.mrf.mxu0
    %v1021 = vadd.f32 0.0, %v1020
    %v1022 = vpop.f32.mrf.mxu0
    %1023 = vmatprep.mubr.f32.mxu0 0.0
    %1024 = vmatmul.mubr.f32.gmra.mxu0 %v648
    %v1025 = vpop.f32.mrf.mxu0
    %v1026 = vadd.f32 0.0, %v1025
    %v1027 = vpop.f32.mrf.mxu0
    %1028 = vmatprep.mubr.f32.mxu0 0.0
    %1029 = vmatmul.mubr.f32.gmra.mxu0 %v651
    %v1030 = vpop.f32.mrf.mxu0
    %v1031 = vadd.f32 0.0, %v1030
    %v1032 = vpop.f32.mrf.mxu0
    %1033 = vmatprep.mubr.f32.mxu0 0.0
    %1034 = vmatmul.mubr.f32.gmra.mxu0 %v654
    %v1035 = vpop.f32.mrf.mxu0
    %v1036 = vadd.f32 0.0, %v1035
    %v1037 = vpop.f32.mrf.mxu0
    %1038 = vmatprep.mubr.f32.mxu0 0.0
    %1039 = vmatmul.mubr.f32.gmra.mxu0 %v657
    %v1040 = vpop.f32.mrf.mxu0
    %v1041 = vadd.f32 0.0, %v1040
    %v1042 = vpop.f32.mrf.mxu0
    %1043 = vdwg.mxu0
    %1044 = vst [vmem:[#allocation2] sm:$0xff] %v726
    %1045 = vst [vmem:[#allocation2 + $0x8] sm:$0xff] %v731
    %1046 = vst [vmem:[#allocation2 + $0x10] sm:$0xff] %v736
    %1047 = vst [vmem:[#allocation2 + $0x18] sm:$0xff] %v741
    %1048 = vst [vmem:[#allocation2 + $0x20] sm:$0xff] %v746
    %1049 = vst [vmem:[#allocation2 + $0x28] sm:$0xff] %v751
    %1050 = vst [vmem:[#allocation2 + $0x30] sm:$0xff] %v756
    %1051 = vst [vmem:[#allocation2 + $0x38] sm:$0xff] %v761
    %1052 = vst [vmem:[#allocation2 + $0x40] sm:$0xff] %v766
    %1053 = vst [vmem:[#allocation2 + $0x48] sm:$0xff] %v771
    %1054 = vst [vmem:[#allocation2 + $0x50] sm:$0xff] %v776
    %1055 = vst [vmem:[#allocation2 + $0x58] sm:$0xff] %v781
    %1056 = vst [vmem:[#allocation2 + $0x60] sm:$0xff] %v786
    %1057 = vst [vmem:[#allocation2 + $0x68] sm:$0xff] %v791
    %1058 = vst [vmem:[#allocation2 + $0x70] sm:$0xff] %v796
    %1059 = vst [vmem:[#allocation2 + $0x78] sm:$0xff] %v801
    %1060 = vst [vmem:[#allocation2 + $0x80] sm:$0xff] %v806
    %1061 = vst [vmem:[#allocation2 + $0x88] sm:$0xff] %v811
    %1062 = vst [vmem:[#allocation2 + $0x90] sm:$0xff] %v816
    %1063 = vst [vmem:[#allocation2 + $0x98] sm:$0xff] %v821
    %1064 = vst [vmem:[#allocation2 + $0xa0] sm:$0xff] %v826
    %1065 = vst [vmem:[#allocation2 + $0xa8] sm:$0xff] %v831
    %1066 = vst [vmem:[#allocation2 + $0xb0] sm:$0xff] %v836
    %1067 = vst [vmem:[#allocation2 + $0xb8] sm:$0xff] %v841
    %1068 = vst [vmem:[#allocation2 + $0xc0] sm:$0xff] %v846
    %1069 = vst [vmem:[#allocation2 + $0xc8] sm:$0xff] %v851
    %1070 = vst [vmem:[#allocation2 + $0xd0] sm:$0xff] %v856
    %1071 = vst [vmem:[#allocation2 + $0xd8] sm:$0xff] %v861
    %1072 = vst [vmem:[#allocation2 + $0xe0] sm:$0xff] %v866
    %1073 = vst [vmem:[#allocation2 + $0xe8] sm:$0xff] %v871
    %1074 = vst [vmem:[#allocation2 + $0xf0] sm:$0xff] %v876
    %1075 = vst [vmem:[#allocation2 + $0xf8] sm:$0xff] %v881
    %1076 = vst [vmem:[#allocation2 + $0x100] sm:$0xff] %v886
    %1077 = vst [vmem:[#allocation2 + $0x108] sm:$0xff] %v891
    %1078 = vst [vmem:[#allocation2 + $0x110] sm:$0xff] %v896
    %1079 = vst [vmem:[#allocation2 + $0x118] sm:$0xff] %v901
    %1080 = vst [vmem:[#allocation2 + $0x120] sm:$0xff] %v906
    %1081 = vst [vmem:[#allocation2 + $0x128] sm:$0xff] %v911
    %1082 = vst [vmem:[#allocation2 + $0x130] sm:$0xff] %v916
    %1083 = vst [vmem:[#allocation2 + $0x138] sm:$0xff] %v921
    %1084 = vst [vmem:[#allocation2 + $0x140] sm:$0xff] %v926
    %1085 = vst [vmem:[#allocation2 + $0x148] sm:$0xff] %v931
    %1086 = vst [vmem:[#allocation2 + $0x150] sm:$0xff] %v936
    %1087 = vst [vmem:[#allocation2 + $0x158] sm:$0xff] %v941
    %1088 = vst [vmem:[#allocation2 + $0x160] sm:$0xff] %v946
    %1089 = vst [vmem:[#allocation2 + $0x168] sm:$0xff] %v951
    %1090 = vst [vmem:[#allocation2 + $0x170] sm:$0xff] %v956
    %1091 = vst [vmem:[#allocation2 + $0x178] sm:$0xff] %v961
    %1092 = vst [vmem:[#allocation2 + $0x180] sm:$0xff] %v966
    %1093 = vst [vmem:[#allocation2 + $0x188] sm:$0xff] %v971
    %1094 = vst [vmem:[#allocation2 + $0x190] sm:$0xff] %v976
    %1095 = vst [vmem:[#allocation2 + $0x198] sm:$0xff] %v981
    %1096 = vst [vmem:[#allocation2 + $0x1a0] sm:$0xff] %v986
    %1097 = vst [vmem:[#allocation2 + $0x1a8] sm:$0xff] %v991
    %1098 = vst [vmem:[#allocation2 + $0x1b0] sm:$0xff] %v996
    %1099 = vst [vmem:[#allocation2 + $0x1b8] sm:$0xff] %v1001
    %1100 = vst [vmem:[#allocation2 + $0x1c0] sm:$0xff] %v1006
    %1101 = vst [vmem:[#allocation2 + $0x1c8] sm:$0xff] %v1011
    %1102 = vst [vmem:[#allocation2 + $0x1d0] sm:$0xff] %v1016
    %1103 = vst [vmem:[#allocation2 + $0x1d8] sm:$0xff] %v1021
    %1104 = vst [vmem:[#allocation2 + $0x1e0] sm:$0xff] %v1026
    %1105 = vst [vmem:[#allocation2 + $0x1e8] sm:$0xff] %v1031
    %1106 = vst [vmem:[#allocation2 + $0x1f0] sm:$0xff] %v1036
    %1107 = vst [vmem:[#allocation2 + $0x1f8] sm:$0xff] %v1041
    // Predicated region
    $region10: #{tpu_custom_call.1} parent=1 // pred_check
      _
    $region11: #{tpu_custom_call.1} parent=1 // pred_check_branch
      %1109 = sbr.rel (0) target = $region13
    $region12: #{tpu_custom_call.1} parent=1 // pred_region
      %s1111 = ssub.s32 8192, 8192
      %1112 = vsyncadd [#allocation3], %s1111
      %s1113 = sshll.u32 [#allocation2], 4
      %s1114 = int_to_ptr.vmem [resolvable:$true] %s1113
      %1119 = dma.vmem_to_hbm [thread:$0]  %s1114, 8192, %s2, [#allocation3], 128, 128, 8
    $region13: #{tpu_custom_call.1} parent=1 // pred_fallthru
      _
    // Predicated region
    $region14: #{tpu_custom_call.1} parent=1 // pred_check
      _
    $region15: #{tpu_custom_call.1} parent=1 // pred_check_branch
      %1121 = sbr.rel (0) target = $region17
    $region16: #{tpu_custom_call.1} parent=1 // pred_region
      %1122 = dma.done [#allocation3], 8192
    $region17: #{tpu_custom_call.1} parent=1 // pred_fallthru
      _
    %1123 = vsyncpa [#allocation3], 1

</llo_original>
